<compile_context>
chip_gen: v5e
topology: v5e:2x2
jax: 0.10.0
libtpu: 0.0.40
codegen_flags: <defaults>
</compile_context>

<pallas_src>
import functools
import math

import jax
import jax.numpy as jnp
from jax.experimental import pallas as pl
from jax.experimental.pallas import tpu as pltpu

_MiB = 1024 * 1024


def _round_up(x, m):
    return ((x + m - 1) // m) * m


def _sublane(dtype):
    # sublane packing: 8 rows for 4-byte, 16 for 2-byte, 32 for 1-byte dtypes
    return {4: 8, 2: 16, 1: 32}.get(jnp.dtype(dtype).itemsize, 8)


def _vmem_budget_bytes():
    """~7/8 of physical VMEM if queryable, else a v7x-safe 48 MiB."""
    try:
        info = pltpu.get_tpu_info()
        cap = getattr(info, "vmem_capacity_bytes", None)
        if cap:
            return int(cap) * 7 // 8
    except Exception:
        pass
    return 48 * _MiB


def _pick_tile(dim_pad, cap):
    """Largest multiple of 128 that divides dim_pad and is <= cap."""
    units = dim_pad // 128
    best = 1
    for t in range(1, units + 1):
        if units % t == 0 and t * 128 <= cap:
            best = t
    return best * 128


# ----------------------------------------------------------------------------
# Fused whole-MLP kernel: intermediate activations never touch HBM.
# ----------------------------------------------------------------------------
def _mlp_kernel(x_ref, *refs, num_layers, apply_act):
    """refs = (w0, b0, w1, b1, ..., o_ref); all feature dims 128-padded."""
    o_ref = refs[-1]
    h = x_ref[...]
    for i in range(num_layers):
        w = refs[2 * i][...]                            # pre-cast at init
        b = refs[2 * i + 1][...].astype(jnp.float32)    # (1, out_pad), f32 add
        acc = jnp.dot(h.astype(w.dtype), w,
                      preferred_element_type=jnp.float32)   # MXU, f32 acc
        acc = acc + b                                        # VPU broadcast
        if apply_act[i]:
            acc = jnp.tanh(acc)                              # EUP slot
        h = acc
    o_ref[...] = h.astype(o_ref.dtype)


def _fused_mlp_forward(x, params, *, apply_act, out_features,
                       single_buffer_weights, vmem_budget):
    """x: (B, in_features). params: [(w_pad (in_pad,out_pad), b_pad (1,out_pad))]."""
    B, in_features = x.shape
    num_layers = len(params)
    in_pad = params[0][0].shape[0]
    out_pad = params[-1][0].shape[1]
    widest_pad = max(w.shape[1] for w, _ in params)

    itemsize = jnp.dtype(x.dtype).itemsize
    sub = _sublane(x.dtype)

    # ---- VMEM accounting -> tile_b and vmem_limit_bytes -------------------
    wbuf = 1 if single_buffer_weights else 2
    weight_bytes = sum(
        (w.size * jnp.dtype(w.dtype).itemsize
         + b.size * jnp.dtype(b.dtype).itemsize) * wbuf
        for w, b in params)
    # per-row activation bytes: double-buffered input+output tiles plus two
    # f32 intermediates of the widest layer.
    act_row_bytes = 2 * in_pad * itemsize + 2 * out_pad * itemsize + 2 * widest_pad * 4
    avail = max(vmem_budget - weight_bytes - 2 * _MiB, sub * act_row_bytes)
    tile_cap = max(sub, min(512, (avail // act_row_bytes) // sub * sub))

    # >=2 grid steps when the batch allows it: the "parallel" batch axis then
    # shards across both TensorCores on v7x (harmless extra step on v5e/v6e).
    if B > sub:
        tile_b = min(tile_cap, _round_up(pl.cdiv(B, 2), sub))
    else:
        tile_b = min(tile_cap, _round_up(max(B, 1), sub))
    b_pad = _round_up(B, tile_b)

    # Pad input only when misaligned (pad/slice are extra un-hidden HBM passes).
    if (b_pad, in_pad) != (B, in_features):
        x_p = jnp.zeros((b_pad, in_pad), x.dtype).at[:B, :in_features].set(x)
    else:
        x_p = x

    # ---- BlockSpecs --------------------------------------------------------
    in_specs = [pl.BlockSpec((tile_b, in_pad), lambda i: (i, 0))]
    flat_params = []
    for w, b in params:
        flat_params += [w, b]
        if single_buffer_weights:
            # Constant index_map -> VMEM-resident across all grid steps; one
            # buffer is enough (default double-buffering doubles footprint).
            in_specs.append(pl.BlockSpec(w.shape, lambda i: (0, 0),
                                         pipeline_mode=pl.Buffered(1)))
            in_specs.append(pl.BlockSpec(b.shape, lambda i: (0, 0),
                                         pipeline_mode=pl.Buffered(1)))
        else:
            in_specs.append(pl.BlockSpec(w.shape, lambda i: (0, 0)))
            in_specs.append(pl.BlockSpec(b.shape, lambda i: (0, 0)))

    # ---- cost estimate + vmem limit ---------------------------------------
    flops = 0
    transcendentals = 0
    bytes_accessed = x_p.size * itemsize + b_pad * out_pad * itemsize
    for li, (w, b) in enumerate(params):
        flops += 2 * b_pad * w.shape[0] * w.shape[1]
        bytes_accessed += (w.size * jnp.dtype(w.dtype).itemsize
                           + b.size * jnp.dtype(b.dtype).itemsize)
        if apply_act[li]:
            transcendentals += b_pad * w.shape[1]
    cost = pl.CostEstimate(flops=flops, transcendentals=transcendentals,
                           bytes_accessed=bytes_accessed)

    need = weight_bytes + tile_b * act_row_bytes + 4 * _MiB
    vmem_limit = int(min(max(need, 32 * _MiB), max(vmem_budget, 32 * _MiB)))

    kernel = functools.partial(_mlp_kernel, num_layers=num_layers,
                               apply_act=tuple(apply_act))

    out = pl.pallas_call(
        kernel,
        out_shape=jax.ShapeDtypeStruct((b_pad, out_pad), x.dtype),
        grid=(b_pad // tile_b,),
        in_specs=in_specs,
        out_specs=pl.BlockSpec((tile_b, out_pad), lambda i: (i, 0)),
        compiler_params=pltpu.CompilerParams(
            dimension_semantics=("parallel",),
            vmem_limit_bytes=vmem_limit),
        cost_estimate=cost,
    )(x_p, *flat_params)

    if (b_pad, out_pad) != (B, out_features):
        out = out[:B, :out_features]
    return out


# ----------------------------------------------------------------------------
# Fallback: per-layer conventionally tiled linear (weights don't fit VMEM).
# ----------------------------------------------------------------------------
def _linear_kernel(x_ref, w_ref, b_ref, o_ref, acc_ref, *, apply_act):
    k = pl.program_id(2)

    @pl.when(k == 0)
    def _():
        acc_ref[...] = jnp.zeros_like(acc_ref)

    w = w_ref[...]
    acc_ref[...] += jnp.dot(x_ref[...].astype(w.dtype), w,
                            preferred_element_type=jnp.float32)

    @pl.when(k == pl.num_programs(2) - 1)
    def _():
        r = acc_ref[...] + b_ref[...].astype(jnp.float32)
        if apply_act:
            r = jnp.tanh(r)
        o_ref[...] = r.astype(o_ref.dtype)


def _tiled_linear(x_p, w, b, *, tm, apply_act, vmem_budget):
    b_rows, k_pad = x_p.shape
    _, n_pad = w.shape
    itemsize = jnp.dtype(x_p.dtype).itemsize
    w_item = jnp.dtype(w.dtype).itemsize

    tk = _pick_tile(k_pad, 512)
    tn = _pick_tile(n_pad, 512)

    need = (2 * (tm * tk * itemsize + tk * tn * w_item + tn * w_item)
            + tm * tn * 4 + 2 * tm * tn * itemsize + 2 * _MiB)
    vmem_limit = int(min(max(need, 32 * _MiB), max(vmem_budget, 32 * _MiB)))

    cost = pl.CostEstimate(
        flops=2 * b_rows * k_pad * n_pad,
        transcendentals=b_rows * n_pad if apply_act else 0,
        bytes_accessed=(b_rows * k_pad + b_rows * n_pad) * itemsize
                       + k_pad * n_pad * w_item + n_pad * w_item)

    kernel = functools.partial(_linear_kernel, apply_act=apply_act)
    return pl.pallas_call(
        kernel,
        out_shape=jax.ShapeDtypeStruct((b_rows, n_pad), x_p.dtype),
        grid=(b_rows // tm, n_pad // tn, k_pad // tk),
        in_specs=[pl.BlockSpec((tm, tk), lambda i, j, k: (i, k)),
                  pl.BlockSpec((tk, tn), lambda i, j, k: (k, j)),
                  pl.BlockSpec((1, tn), lambda i, j, k: (0, j))],
        out_specs=pl.BlockSpec((tm, tn), lambda i, j, k: (i, j)),
        scratch_shapes=[pltpu.VMEM((tm, tn), jnp.float32)],
        compiler_params=pltpu.CompilerParams(
            dimension_semantics=("parallel", "parallel", "arbitrary"),
            vmem_limit_bytes=vmem_limit),
        cost_estimate=cost,
    )(x_p, w, b)


def _layered_mlp_forward(x, params, *, apply_act, out_features, vmem_budget):
    """Each layer is its own tiled pallas_call (activations round-trip HBM).
    Padded lanes stay exactly zero through every layer (zero weight rows/cols,
    zero bias, tanh(0)=0), so chaining padded shapes is safe."""
    B, in_features = x.shape
    in_pad = params[0][0].shape[0]
    out_pad = params[-1][0].shape[1]
    sub = _sublane(x.dtype)

    tm = min(256, _round_up(max(B, 1), sub))
    if B > sub:
        tm = min(tm, _round_up(pl.cdiv(B, 2), sub))
    b_pad = _round_up(B, tm)

    if (b_pad, in_pad) != (B, in_features):
        h = jnp.zeros((b_pad, in_pad), x.dtype).at[:B, :in_features].set(x)
    else:
        h = x

    for li, (w, b) in enumerate(params):
        h = _tiled_linear(h, w, b, tm=tm, apply_act=apply_act[li],
                          vmem_budget=vmem_budget)

    if (b_pad, out_pad) != (B, out_features):
        h = h[:B, :out_features]
    return h


# ----------------------------------------------------------------------------
# Module wrapper
# ----------------------------------------------------------------------------
class FeedForwardPallas:
    """JAX/Pallas port of model/layers/feedforward.py::FeedForward."""

    def __init__(self, input_size, output_size, num_layers=1, hidden_size=None,
                 activation='Tanh', bias=True, no_activation_last_layer=False,
                 key=None, dtype=jnp.float32, compute_dtype=jnp.float32,
                 prefer_fused=True):
        assert activation == 'Tanh', "only Tanh is implemented"
        # TODO(synk): other nn.* activation strings (ReLU, GELU, ...) would be
        # additional static branches in the kernels.
        self.output_size = output_size
        self.no_activation_last_layer = no_activation_last_layer
        self._prefer_fused = prefer_fused

        n_inputs = [input_size] + [hidden_size] * (num_layers - 1)
        n_outputs = [hidden_size] * (num_layers - 1) + [output_size]

        if key is None:
            key = jax.random.PRNGKey(0)

        self._orig_params = []     # PyTorch-layout (out, in), for reference
        self._padded_params = []   # kernel-layout (in_pad, out_pad)
        for n_in, n_out in zip(n_inputs, n_outputs):
            key, kw, kb = jax.random.split(key, 3)
            # PyTorch nn.Linear default init: U(-1/sqrt(fan_in), 1/sqrt(fan_in))
            bound = 1.0 / math.sqrt(n_in)
            w = jax.random.uniform(kw, (n_out, n_in), dtype, -bound, bound)
            if bias:
                b = jax.random.uniform(kb, (n_out,), dtype, -bound, bound)
            else:
                b = jnp.zeros((n_out,), dtype)
            self._orig_params.append((w, b))

            in_pad = _round_up(n_in, 128)
            out_pad = _round_up(n_out, 128)
            # Pre-transpose to (in, out), zero-pad to 128-lane multiples, and
            # pre-cast to compute_dtype ONCE at init (bf16 on v6e/v7x hits the
            # bf16-native MXU and halves resident VMEM; f32 default here for
            # exact parity with the reference).
            w_pad = (jnp.zeros((in_pad, out_pad), dtype)
                     .at[:n_in, :n_out].set(w.T).astype(compute_dtype))
            # Bias kept at full precision: bias-add and tanh run in f32 (v5e
            # VPU/EUP have no bf16 path).
            b_pad = jnp.zeros((1, out_pad), dtype).at[0, :n_out].set(b)
            self._padded_params.append((w_pad, b_pad))

        n = num_layers
        self._apply_act = tuple(
            (not no_activation_last_layer) or (i < n - 1) for i in range(n))

        self._forward = None
        self._candidates = None

    def _build_candidates(self):
        budget = _vmem_budget_bytes()
        resident = sum(int(w.nbytes) + int(b.nbytes)
                       for w, b in self._padded_params)
        common = dict(apply_act=self._apply_act, out_features=self.output_size)
        cands = []
        if self._prefer_fused and resident + 8 * _MiB <= budget:
            if hasattr(pl, "Buffered"):
                cands.append(jax.jit(functools.partial(
                    _fused_mlp_forward, single_buffer_weights=True,
                    vmem_budget=budget, **common)))
            if resident * 2 + 8 * _MiB <= budget:
                # Default double-buffered weights (used if Buffered(1) is
                # rejected by this JAX/Mosaic version).
                cands.append(jax.jit(functools.partial(
                    _fused_mlp_forward, single_buffer_weights=False,
                    vmem_budget=budget, **common)))
        # Per-layer tiled path: always available; used when resident weights
        # outgrow the VMEM budget (bites first on v7x's 64 MiB).
        cands.append(jax.jit(functools.partial(
            _layered_mlp_forward, vmem_budget=budget, **common)))
        return cands

    def __call__(self, x):
        if self._forward is not None:
            return self._forward(x, self._padded_params)
        if self._candidates is None:
            self._candidates = self._build_candidates()
        last_err = None
        for fwd in self._candidates:
            try:
                out = fwd(x, self._padded_params)
            except Exception as e:   # lowering/compile failure -> next candidate
                last_err = e
                continue
            self._forward = fwd
            return out
        raise last_err


def _reference(model, x):
    # Pure-JAX reference on the original (unpadded, PyTorch-layout) params.
    n = len(model._orig_params)
    for i, (w, b) in enumerate(model._orig_params):
        x = x @ w.T + b
        if (not model.no_activation_last_layer) or (i < n - 1):
            x = jnp.tanh(x)
    return x


if __name__ == "__main__":
    key = jax.random.PRNGKey(0)
    kx, kp, kx2 = jax.random.split(key, 3)

    batch, input_size, hidden_size, output_size = 8, 16, 32, 8
    x = jax.random.normal(kx, (batch, input_size), jnp.float32)

    # 1) Fused path: 2 layers, Tanh on every layer.
    model = FeedForwardPallas(input_size, output_size, num_layers=2,
                              hidden_size=hidden_size, activation='Tanh',
                              bias=True, no_activation_last_layer=False, key=kp)
    out = jax.block_until_ready(model(x))
    ref = _reference(model, x)
    assert out.shape == (batch, output_size)
    assert jnp.allclose(out, ref, atol=1e-5, rtol=1e-5)

    # 2) Fused path: larger batch (multi-step parallel batch grid), 3 layers,
    #    no activation on the last layer.
    model2 = FeedForwardPallas(input_size, output_size, num_layers=3,
                               hidden_size=hidden_size, activation='Tanh',
                               bias=True, no_activation_last_layer=True, key=kp)
    x2 = jax.random.normal(kx2, (300, input_size), jnp.float32)
    out2 = jax.block_until_ready(model2(x2))
    ref2 = _reference(model2, x2)
    assert out2.shape == (300, output_size)
    assert jnp.allclose(out2, ref2, atol=1e-5, rtol=1e-5)

    # 3) Per-layer tiled fallback path (used when resident weights outgrow
    #    VMEM); forced here so it is also validated at small shapes.
    model3 = FeedForwardPallas(input_size, output_size, num_layers=2,
                               hidden_size=hidden_size, activation='Tanh',
                               bias=True, no_activation_last_layer=False,
                               key=kp, prefer_fused=False)
    out3 = jax.block_until_ready(model3(x))
    ref3 = _reference(model3, x)
    assert out3.shape == (batch, output_size)
    assert jnp.allclose(out3, ref3, atol=1e-5, rtol=1e-5)

    print("KERNEL_OK")
</pallas_src>

<mosaic_0001>
module attributes {stable_mosaic.version = 11 : i64} {
  func.func @_mlp_kernel(%arg0: i32, %arg1: memref<8x128xf32, #tpu.memory_space<vmem>>, %arg2: memref<128x128xf32, #tpu.memory_space<vmem>>, %arg3: memref<1x128xf32, #tpu.memory_space<vmem>>, %arg4: memref<128x128xf32, #tpu.memory_space<vmem>>, %arg5: memref<1x128xf32, #tpu.memory_space<vmem>>, %arg6: memref<8x128xf32, #tpu.memory_space<vmem>>) attributes {dimension_semantics = [#tpu.dimension_semantics<parallel>], iteration_bounds = array<i64: 1>, scalar_prefetch = 0 : i64, scratch_operands = 0 : i64, tpu.core_type = #tpu.core_type<tc>, window_params = [{transform_indices = @transform_0, window_bounds = array<i64: 8, 128>}, {pipeline_mode = #tpu.pipeline_mode<synchronous>, transform_indices = @transform_1, window_bounds = array<i64: 128, 128>}, {pipeline_mode = #tpu.pipeline_mode<synchronous>, transform_indices = @transform_2, window_bounds = array<i64: 1, 128>}, {pipeline_mode = #tpu.pipeline_mode<synchronous>, transform_indices = @transform_3, window_bounds = array<i64: 128, 128>}, {pipeline_mode = #tpu.pipeline_mode<synchronous>, transform_indices = @transform_4, window_bounds = array<i64: 1, 128>}, {transform_indices = @transform_5, window_bounds = array<i64: 8, 128>}]} {
    %c0 = arith.constant 0 : index
    %c0_0 = arith.constant 0 : index
    %0 = vector.load %arg1[%c0, %c0_0] : memref<8x128xf32, #tpu.memory_space<vmem>>, vector<8x128xf32>
    %c0_1 = arith.constant 0 : index
    %c0_2 = arith.constant 0 : index
    %1 = vector.load %arg2[%c0_1, %c0_2] : memref<128x128xf32, #tpu.memory_space<vmem>>, vector<128x128xf32>
    %c0_3 = arith.constant 0 : index
    %c0_4 = arith.constant 0 : index
    %2 = vector.load %arg3[%c0_3, %c0_4] : memref<1x128xf32, #tpu.memory_space<vmem>>, vector<1x128xf32>
    %cst = arith.constant dense<0.000000e+00> : vector<8x128xf32>
    %3 = tpu.matmul %0, %1, %cst {dimension_numbers = #tpu.dot_dimension_numbers<[1], [0], [0], [1], [0, 0, 1, 1], [], []>} : vector<8x128xf32>, vector<128x128xf32>, vector<8x128xf32> -> vector<8x128xf32>
    %4 = vector.broadcast %2 : vector<1x128xf32> to vector<8x128xf32>
    %5 = arith.addf %3, %4 : vector<8x128xf32>
    %6 = math.tanh %5 : vector<8x128xf32>
    %c0_5 = arith.constant 0 : index
    %c0_6 = arith.constant 0 : index
    %7 = vector.load %arg4[%c0_5, %c0_6] : memref<128x128xf32, #tpu.memory_space<vmem>>, vector<128x128xf32>
    %c0_7 = arith.constant 0 : index
    %c0_8 = arith.constant 0 : index
    %8 = vector.load %arg5[%c0_7, %c0_8] : memref<1x128xf32, #tpu.memory_space<vmem>>, vector<1x128xf32>
    %cst_9 = arith.constant dense<0.000000e+00> : vector<8x128xf32>
    %9 = tpu.matmul %6, %7, %cst_9 {dimension_numbers = #tpu.dot_dimension_numbers<[1], [0], [0], [1], [0, 0, 1, 1], [], []>} : vector<8x128xf32>, vector<128x128xf32>, vector<8x128xf32> -> vector<8x128xf32>
    %10 = vector.broadcast %8 : vector<1x128xf32> to vector<8x128xf32>
    %11 = arith.addf %9, %10 : vector<8x128xf32>
    %12 = math.tanh %11 : vector<8x128xf32>
    %c0_10 = arith.constant 0 : index
    %c0_11 = arith.constant 0 : index
    %13 = vector.load %arg6[%c0_10, %c0_11] : memref<8x128xf32, #tpu.memory_space<vmem>>, vector<8x128xf32>
    tpu.vector_store %arg6[%c0_10, %c0_11], %12 {strides = array<i32>} : memref<8x128xf32, #tpu.memory_space<vmem>>, vector<8x128xf32>,
    return
  }
  func.func @transform_0(%arg0: i32) -> (i32, i32) {
    %c0_i32 = arith.constant 0 : i32
    %c0_i32_0 = arith.constant 0 : i32
    return %arg0, %c0_i32 : i32, i32
  }
  func.func @transform_1(%arg0: i32) -> (i32, i32) {
    %c0_i32 = arith.constant 0 : i32
    %c0_i32_0 = arith.constant 0 : i32
    %c0_i32_1 = arith.constant 0 : i32
    return %c0_i32, %c0_i32_0 : i32, i32
  }
  func.func @transform_2(%arg0: i32) -> (i32, i32) {
    %c0_i32 = arith.constant 0 : i32
    %c0_i32_0 = arith.constant 0 : i32
    %c0_i32_1 = arith.constant 0 : i32
    return %c0_i32, %c0_i32_0 : i32, i32
  }
  func.func @transform_3(%arg0: i32) -> (i32, i32) {
    %c0_i32 = arith.constant 0 : i32
    %c0_i32_0 = arith.constant 0 : i32
    %c0_i32_1 = arith.constant 0 : i32
    return %c0_i32, %c0_i32_0 : i32, i32
  }
  func.func @transform_4(%arg0: i32) -> (i32, i32) {
    %c0_i32 = arith.constant 0 : i32
    %c0_i32_0 = arith.constant 0 : i32
    %c0_i32_1 = arith.constant 0 : i32
    return %c0_i32, %c0_i32_0 : i32, i32
  }
  func.func @transform_5(%arg0: i32) -> (i32, i32) {
    %c0_i32 = arith.constant 0 : i32
    %c0_i32_0 = arith.constant 0 : i32
    return %arg0, %c0_i32 : i32, i32
  }
}

module attributes {stable_mosaic.version = 11 : i64} {
  func.func @_mlp_kernel(%arg0: i32, %arg1: memref<8x128xf32, #tpu.memory_space<vmem>>, %arg2: memref<128x128xf32, #tpu.memory_space<vmem>>, %arg3: memref<1x128xf32, #tpu.memory_space<vmem>>, %arg4: memref<128x128xf32, #tpu.memory_space<vmem>>, %arg5: memref<1x128xf32, #tpu.memory_space<vmem>>, %arg6: memref<8x128xf32, #tpu.memory_space<vmem>>) attributes {dimension_semantics = [#tpu.dimension_semantics<parallel>], iteration_bounds = array<i64: 1>, scalar_prefetch = 0 : i64, scratch_operands = 0 : i64, tpu.core_type = #tpu.core_type<tc>, window_params = [{transform_indices = @transform_0, window_bounds = array<i64: 8, 128>}, {pipeline_mode = #tpu.pipeline_mode<synchronous>, transform_indices = @transform_1, window_bounds = array<i64: 128, 128>}, {pipeline_mode = #tpu.pipeline_mode<synchronous>, transform_indices = @transform_2, window_bounds = array<i64: 1, 128>}, {pipeline_mode = #tpu.pipeline_mode<synchronous>, transform_indices = @transform_3, window_bounds = array<i64: 128, 128>}, {pipeline_mode = #tpu.pipeline_mode<synchronous>, transform_indices = @transform_4, window_bounds = array<i64: 1, 128>}, {transform_indices = @transform_5, window_bounds = array<i64: 8, 128>}]} {
    %c0 = arith.constant 0 : index
    %c0_0 = arith.constant 0 : index
    %0 = vector.load %arg1[%c0, %c0_0] : memref<8x128xf32, #tpu.memory_space<vmem>>, vector<8x128xf32>
    %c0_1 = arith.constant 0 : index
    %c0_2 = arith.constant 0 : index
    %1 = vector.load %arg2[%c0_1, %c0_2] : memref<128x128xf32, #tpu.memory_space<vmem>>, vector<128x128xf32>
    %c0_3 = arith.constant 0 : index
    %c0_4 = arith.constant 0 : index
    %2 = vector.load %arg3[%c0_3, %c0_4] : memref<1x128xf32, #tpu.memory_space<vmem>>, vector<1x128xf32>
    %cst = arith.constant dense<0.000000e+00> : vector<8x128xf32>
    %3 = tpu.matmul %0, %1, %cst {dimension_numbers = #tpu.dot_dimension_numbers<[1], [0], [0], [1], [0, 0, 1, 1], [], []>} : vector<8x128xf32>, vector<128x128xf32>, vector<8x128xf32> -> vector<8x128xf32>
    %4 = vector.broadcast %2 : vector<1x128xf32> to vector<8x128xf32>
    %5 = arith.addf %3, %4 : vector<8x128xf32>
    %6 = math.tanh %5 : vector<8x128xf32>
    %c0_5 = arith.constant 0 : index
    %c0_6 = arith.constant 0 : index
    %7 = vector.load %arg4[%c0_5, %c0_6] : memref<128x128xf32, #tpu.memory_space<vmem>>, vector<128x128xf32>
    %c0_7 = arith.constant 0 : index
    %c0_8 = arith.constant 0 : index
    %8 = vector.load %arg5[%c0_7, %c0_8] : memref<1x128xf32, #tpu.memory_space<vmem>>, vector<1x128xf32>
    %cst_9 = arith.constant dense<0.000000e+00> : vector<8x128xf32>
    %9 = tpu.matmul %6, %7, %cst_9 {dimension_numbers = #tpu.dot_dimension_numbers<[1], [0], [0], [1], [0, 0, 1, 1], [], []>} : vector<8x128xf32>, vector<128x128xf32>, vector<8x128xf32> -> vector<8x128xf32>
    %10 = vector.broadcast %8 : vector<1x128xf32> to vector<8x128xf32>
    %11 = arith.addf %9, %10 : vector<8x128xf32>
    %12 = math.tanh %11 : vector<8x128xf32>
    %c0_10 = arith.constant 0 : index
    %c0_11 = arith.constant 0 : index
    %13 = vector.load %arg6[%c0_10, %c0_11] : memref<8x128xf32, #tpu.memory_space<vmem>>, vector<8x128xf32>
    tpu.vector_store %arg6[%c0_10, %c0_11], %12 {strides = array<i32>} : memref<8x128xf32, #tpu.memory_space<vmem>>, vector<8x128xf32>,
    return
  }
  func.func @transform_0(%arg0: i32) -> (i32, i32) {
    %c0_i32 = arith.constant 0 : i32
    %c0_i32_0 = arith.constant 0 : i32
    return %arg0, %c0_i32 : i32, i32
  }
  func.func @transform_1(%arg0: i32) -> (i32, i32) {
    %c0_i32 = arith.constant 0 : i32
    %c0_i32_0 = arith.constant 0 : i32
    %c0_i32_1 = arith.constant 0 : i32
    return %c0_i32, %c0_i32_0 : i32, i32
  }
  func.func @transform_2(%arg0: i32) -> (i32, i32) {
    %c0_i32 = arith.constant 0 : i32
    %c0_i32_0 = arith.constant 0 : i32
    %c0_i32_1 = arith.constant 0 : i32
    return %c0_i32, %c0_i32_0 : i32, i32
  }
  func.func @transform_3(%arg0: i32) -> (i32, i32) {
    %c0_i32 = arith.constant 0 : i32
    %c0_i32_0 = arith.constant 0 : i32
    %c0_i32_1 = arith.constant 0 : i32
    return %c0_i32, %c0_i32_0 : i32, i32
  }
  func.func @transform_4(%arg0: i32) -> (i32, i32) {
    %c0_i32 = arith.constant 0 : i32
    %c0_i32_0 = arith.constant 0 : i32
    %c0_i32_1 = arith.constant 0 : i32
    return %c0_i32, %c0_i32_0 : i32, i32
  }
  func.func @transform_5(%arg0: i32) -> (i32, i32) {
    %c0_i32 = arith.constant 0 : i32
    %c0_i32_0 = arith.constant 0 : i32
    return %arg0, %c0_i32 : i32, i32
  }
}

module attributes {stable_mosaic.version = 11 : i64} {
  func.func @_linear_kernel(%arg0: i32, %arg1: i32, %arg2: i32, %arg3: memref<8x128xf32, #tpu.memory_space<vmem>>, %arg4: memref<128x128xf32, #tpu.memory_space<vmem>>, %arg5: memref<1x128xf32, #tpu.memory_space<vmem>>, %arg6: memref<8x128xf32, #tpu.memory_space<vmem>>, %arg7: memref<8x128xf32, #tpu.memory_space<vmem>>) attributes {dimension_semantics = [#tpu.dimension_semantics<parallel>, #tpu.dimension_semantics<parallel>, #tpu.dimension_semantics<arbitrary>], iteration_bounds = array<i64: 1, 1, 1>, scalar_prefetch = 0 : i64, scratch_operands = 1 : i64, tpu.core_type = #tpu.core_type<tc>, window_params = [{transform_indices = @transform_0, window_bounds = array<i64: 8, 128>}, {transform_indices = @transform_1, window_bounds = array<i64: 128, 128>}, {transform_indices = @transform_2, window_bounds = array<i64: 1, 128>}, {transform_indices = @transform_3, window_bounds = array<i64: 8, 128>}]} {
    %c0_i32 = arith.constant 0 : i32
    %0 = arith.cmpi eq, %arg2, %c0_i32 : i32
    %1 = arith.extui %0 : i1 to i32
    %c0_i32_0 = arith.constant 0 : i32
    %2 = arith.cmpi ne, %1, %c0_i32_0 : i32
    scf.if %2 {
      %cst_10 = arith.constant 0.000000e+00 : f32
      %12 = vector.broadcast %cst_10 : f32 to vector<8x128xf32>
      %c0_11 = arith.constant 0 : index
      %c0_12 = arith.constant 0 : index
      %13 = vector.load %arg7[%c0_11, %c0_12] : memref<8x128xf32, #tpu.memory_space<vmem>>, vector<8x128xf32>
      tpu.vector_store %arg7[%c0_11, %c0_12], %12 {strides = array<i32>} : memref<8x128xf32, #tpu.memory_space<vmem>>, vector<8x128xf32>,
    } else {
    }
    %c0 = arith.constant 0 : index
    %c0_1 = arith.constant 0 : index
    %3 = vector.load %arg4[%c0, %c0_1] : memref<128x128xf32, #tpu.memory_space<vmem>>, vector<128x128xf32>
    %c0_2 = arith.constant 0 : index
    %c0_3 = arith.constant 0 : index
    %4 = vector.load %arg7[%c0_2, %c0_3] : memref<8x128xf32, #tpu.memory_space<vmem>>, vector<8x128xf32>
    %c0_4 = arith.constant 0 : index
    %c0_5 = arith.constant 0 : index
    %5 = vector.load %arg3[%c0_4, %c0_5] : memref<8x128xf32, #tpu.memory_space<vmem>>, vector<8x128xf32>
    %cst = arith.constant dense<0.000000e+00> : vector<8x128xf32>
    %6 = tpu.matmul %5, %3, %cst {dimension_numbers = #tpu.dot_dimension_numbers<[1], [0], [0], [1], [0, 0, 1, 1], [], []>} : vector<8x128xf32>, vector<128x128xf32>, vector<8x128xf32> -> vector<8x128xf32>
    %7 = arith.addf %4, %6 : vector<8x128xf32>
    %c0_6 = arith.constant 0 : index
    %c0_7 = arith.constant 0 : index
    %8 = vector.load %arg7[%c0_6, %c0_7] : memref<8x128xf32, #tpu.memory_space<vmem>>, vector<8x128xf32>
    tpu.vector_store %arg7[%c0_6, %c0_7], %7 {strides = array<i32>} : memref<8x128xf32, #tpu.memory_space<vmem>>, vector<8x128xf32>,
    %c0_i32_8 = arith.constant 0 : i32
    %9 = arith.cmpi eq, %arg2, %c0_i32_8 : i32
    %10 = arith.extui %9 : i1 to i32
    %c0_i32_9 = arith.constant 0 : i32
    %11 = arith.cmpi ne, %10, %c0_i32_9 : i32
    scf.if %11 {
      %c0_10 = arith.constant 0 : index
      %c0_11 = arith.constant 0 : index
      %12 = vector.load %arg7[%c0_10, %c0_11] : memref<8x128xf32, #tpu.memory_space<vmem>>, vector<8x128xf32>
      %c0_12 = arith.constant 0 : index
      %c0_13 = arith.constant 0 : index
      %13 = vector.load %arg5[%c0_12, %c0_13] : memref<1x128xf32, #tpu.memory_space<vmem>>, vector<1x128xf32>
      %14 = vector.broadcast %13 : vector<1x128xf32> to vector<8x128xf32>
      %15 = arith.addf %12, %14 : vector<8x128xf32>
      %16 = math.tanh %15 : vector<8x128xf32>
      %c0_14 = arith.constant 0 : index
      %c0_15 = arith.constant 0 : index
      %17 = vector.load %arg6[%c0_14, %c0_15] : memref<8x128xf32, #tpu.memory_space<vmem>>, vector<8x128xf32>
      tpu.vector_store %arg6[%c0_14, %c0_15], %16 {strides = array<i32>} : memref<8x128xf32, #tpu.memory_space<vmem>>, vector<8x128xf32>,
    } else {
    }
    return
  }
  func.func @transform_0(%arg0: i32, %arg1: i32, %arg2: i32) -> (i32, i32) {
    %c0_i32 = arith.constant 0 : i32
    return %arg0, %arg2 : i32, i32
  }
  func.func @transform_1(%arg0: i32, %arg1: i32, %arg2: i32) -> (i32, i32) {
    %c0_i32 = arith.constant 0 : i32
    return %arg2, %arg1 : i32, i32
  }
  func.func @transform_2(%arg0: i32, %arg1: i32, %arg2: i32) -> (i32, i32) {
    %c0_i32 = arith.constant 0 : i32
    %c0_i32_0 = arith.constant 0 : i32
    return %c0_i32, %arg1 : i32, i32
  }
  func.func @transform_3(%arg0: i32, %arg1: i32, %arg2: i32) -> (i32, i32) {
    %c0_i32 = arith.constant 0 : i32
    return %arg0, %arg1 : i32, i32
  }
}

module attributes {stable_mosaic.version = 11 : i64} {
  func.func @_linear_kernel(%arg0: i32, %arg1: i32, %arg2: i32, %arg3: memref<8x128xf32, #tpu.memory_space<vmem>>, %arg4: memref<128x128xf32, #tpu.memory_space<vmem>>, %arg5: memref<1x128xf32, #tpu.memory_space<vmem>>, %arg6: memref<8x128xf32, #tpu.memory_space<vmem>>, %arg7: memref<8x128xf32, #tpu.memory_space<vmem>>) attributes {dimension_semantics = [#tpu.dimension_semantics<parallel>, #tpu.dimension_semantics<parallel>, #tpu.dimension_semantics<arbitrary>], iteration_bounds = array<i64: 1, 1, 1>, scalar_prefetch = 0 : i64, scratch_operands = 1 : i64, tpu.core_type = #tpu.core_type<tc>, window_params = [{transform_indices = @transform_0, window_bounds = array<i64: 8, 128>}, {transform_indices = @transform_1, window_bounds = array<i64: 128, 128>}, {transform_indices = @transform_2, window_bounds = array<i64: 1, 128>}, {transform_indices = @transform_3, window_bounds = array<i64: 8, 128>}]} {
    %c0_i32 = arith.constant 0 : i32
    %0 = arith.cmpi eq, %arg2, %c0_i32 : i32
    %1 = arith.extui %0 : i1 to i32
    %c0_i32_0 = arith.constant 0 : i32
    %2 = arith.cmpi ne, %1, %c0_i32_0 : i32
    scf.if %2 {
      %cst_10 = arith.constant 0.000000e+00 : f32
      %12 = vector.broadcast %cst_10 : f32 to vector<8x128xf32>
      %c0_11 = arith.constant 0 : index
      %c0_12 = arith.constant 0 : index
      %13 = vector.load %arg7[%c0_11, %c0_12] : memref<8x128xf32, #tpu.memory_space<vmem>>, vector<8x128xf32>
      tpu.vector_store %arg7[%c0_11, %c0_12], %12 {strides = array<i32>} : memref<8x128xf32, #tpu.memory_space<vmem>>, vector<8x128xf32>,
    } else {
    }
    %c0 = arith.constant 0 : index
    %c0_1 = arith.constant 0 : index
    %3 = vector.load %arg4[%c0, %c0_1] : memref<128x128xf32, #tpu.memory_space<vmem>>, vector<128x128xf32>
    %c0_2 = arith.constant 0 : index
    %c0_3 = arith.constant 0 : index
    %4 = vector.load %arg7[%c0_2, %c0_3] : memref<8x128xf32, #tpu.memory_space<vmem>>, vector<8x128xf32>
    %c0_4 = arith.constant 0 : index
    %c0_5 = arith.constant 0 : index
    %5 = vector.load %arg3[%c0_4, %c0_5] : memref<8x128xf32, #tpu.memory_space<vmem>>, vector<8x128xf32>
    %cst = arith.constant dense<0.000000e+00> : vector<8x128xf32>
    %6 = tpu.matmul %5, %3, %cst {dimension_numbers = #tpu.dot_dimension_numbers<[1], [0], [0], [1], [0, 0, 1, 1], [], []>} : vector<8x128xf32>, vector<128x128xf32>, vector<8x128xf32> -> vector<8x128xf32>
    %7 = arith.addf %4, %6 : vector<8x128xf32>
    %c0_6 = arith.constant 0 : index
    %c0_7 = arith.constant 0 : index
    %8 = vector.load %arg7[%c0_6, %c0_7] : memref<8x128xf32, #tpu.memory_space<vmem>>, vector<8x128xf32>
    tpu.vector_store %arg7[%c0_6, %c0_7], %7 {strides = array<i32>} : memref<8x128xf32, #tpu.memory_space<vmem>>, vector<8x128xf32>,
    %c0_i32_8 = arith.constant 0 : i32
    %9 = arith.cmpi eq, %arg2, %c0_i32_8 : i32
    %10 = arith.extui %9 : i1 to i32
    %c0_i32_9 = arith.constant 0 : i32
    %11 = arith.cmpi ne, %10, %c0_i32_9 : i32
    scf.if %11 {
      %c0_10 = arith.constant 0 : index
      %c0_11 = arith.constant 0 : index
      %12 = vector.load %arg7[%c0_10, %c0_11] : memref<8x128xf32, #tpu.memory_space<vmem>>, vector<8x128xf32>
      %c0_12 = arith.constant 0 : index
      %c0_13 = arith.constant 0 : index
      %13 = vector.load %arg5[%c0_12, %c0_13] : memref<1x128xf32, #tpu.memory_space<vmem>>, vector<1x128xf32>
      %14 = vector.broadcast %13 : vector<1x128xf32> to vector<8x128xf32>
      %15 = arith.addf %12, %14 : vector<8x128xf32>
      %16 = math.tanh %15 : vector<8x128xf32>
      %c0_14 = arith.constant 0 : index
      %c0_15 = arith.constant 0 : index
      %17 = vector.load %arg6[%c0_14, %c0_15] : memref<8x128xf32, #tpu.memory_space<vmem>>, vector<8x128xf32>
      tpu.vector_store %arg6[%c0_14, %c0_15], %16 {strides = array<i32>} : memref<8x128xf32, #tpu.memory_space<vmem>>, vector<8x128xf32>,
    } else {
    }
    return
  }
  func.func @transform_0(%arg0: i32, %arg1: i32, %arg2: i32) -> (i32, i32) {
    %c0_i32 = arith.constant 0 : i32
    return %arg0, %arg2 : i32, i32
  }
  func.func @transform_1(%arg0: i32, %arg1: i32, %arg2: i32) -> (i32, i32) {
    %c0_i32 = arith.constant 0 : i32
    return %arg2, %arg1 : i32, i32
  }
  func.func @transform_2(%arg0: i32, %arg1: i32, %arg2: i32) -> (i32, i32) {
    %c0_i32 = arith.constant 0 : i32
    %c0_i32_0 = arith.constant 0 : i32
    return %c0_i32, %arg1 : i32, i32
  }
  func.func @transform_3(%arg0: i32, %arg1: i32, %arg2: i32) -> (i32, i32) {
    %c0_i32 = arith.constant 0 : i32
    return %arg0, %arg1 : i32, i32
  }
}

</mosaic_0001>

<llo_original>
// kernel: _fused_mlp_forward.1
$region0: #{_fused_mlp_forward.1}
  #allocation0 [shape = 'u32[]', space=smem, size = 0x4, offset = 0x4, fixed_abs, tag = 'smem constant byte address 0x4 - core index']
  #allocation1 [shape = 'u32[72,128]{1,0:T(1,128)}', space=vmem, size = 0x9000, scoped, tag = 'internal scratch']
  %s0 = inlined_call_operand.vmem [shape: f32[8,128], index: 0, kind: input, shape index: {}]
  %s1 = inlined_call_operand.hbm [shape: f32[128,128], index: 1, kind: input, shape index: {}]
  %s2 = inlined_call_operand.vmem [shape: f32[1,128], index: 2, kind: input, shape index: {}]
  %s3 = inlined_call_operand.hbm [shape: f32[128,128], index: 3, kind: input, shape index: {}]
  %s4 = inlined_call_operand.vmem [shape: f32[1,128], index: 4, kind: input, shape index: {}]
  %s5 = inlined_call_operand.hbm [shape: f32[8,128], index: 5, kind: output, shape index: {}]
  %s6 = sld [smem:[#allocation0]]
  $region38: #{_fused_mlp_forward.1} parent=0
    _
  %s8 = ssub.s32 1, %s6
  %s9 = scalar_select 0, %s8, %s6
  $region1: #{_fused_mlp_forward.1} parent=0
    #allocation2 [shape = 'u8[65536]{0}', space=vmem, size = 0x10000, scoped, tag = 'input window, operand 1, single buffered']
    #allocation3 [shape = 's32[1]{0}', space=sflag, size = 0x4, scoped, tag = 'scoped memory for _fused_mlp_forward.1']
    #allocation4 [shape = 's32[1]{0}', space=sflag, size = 0x4, scoped, tag = 'scoped memory for _fused_mlp_forward.1']
    #allocation5 [shape = 'u8[65536]{0}', space=vmem, size = 0x10000, scoped, tag = 'input window, operand 3, single buffered']
    #allocation6 [shape = 's32[1]{0}', space=sflag, size = 0x4, scoped, tag = 'scoped memory for _fused_mlp_forward.1']
    #allocation7 [shape = 'u8[4096]{0}', space=vmem, size = 0x1000, scoped, tag = 'output window, operand 0, single buffered']
    %10 = vsyncpa [#allocation3], 0
    %11 = vsyncpa [#allocation6], 0
    %12 = vsyncpa [#allocation4], 0
    // Predicated region
    $region2: #{_fused_mlp_forward.1} parent=1 // pred_check
      _
    $region3: #{_fused_mlp_forward.1} parent=1 // pred_check_branch
      %14 = sbr.rel (0) target = $region5
    $region4: #{_fused_mlp_forward.1} parent=1 // pred_region
      _
    $region5: #{_fused_mlp_forward.1} parent=1 // pred_fallthru
      _
    // Predicated region
    $region6: #{_fused_mlp_forward.1} parent=1 // pred_check
      _
    $region7: #{_fused_mlp_forward.1} parent=1 // pred_check_branch
      %16 = sbr.rel (0) target = $region9
    $region8: #{_fused_mlp_forward.1} parent=1 // pred_region
      %18 = vsyncadd [#allocation3], 0
      %s19 = sshll.u32 %s1, 4
      %s20 = int_to_ptr.hbm [resolvable:$true] %s19
      %s21 = sshll.u32 [#allocation2], 4
      %s22 = int_to_ptr.vmem [resolvable:$true] %s21
      %27 = dma.hbm_to_vmem [thread:$0]  %s20, 2048, %s22, [#allocation3], 128, 128, 8
    $region9: #{_fused_mlp_forward.1} parent=1 // pred_fallthru
      _
    // Predicated region
    $region10: #{_fused_mlp_forward.1} parent=1 // pred_check
      _
    $region11: #{_fused_mlp_forward.1} parent=1 // pred_check_branch
      %29 = sbr.rel (0) target = $region13
    $region12: #{_fused_mlp_forward.1} parent=1 // pred_region
      _
    $region13: #{_fused_mlp_forward.1} parent=1 // pred_fallthru
      _
    // Predicated region
    $region14: #{_fused_mlp_forward.1} parent=1 // pred_check
      _
    $region15: #{_fused_mlp_forward.1} parent=1 // pred_check_branch
      %31 = sbr.rel (0) target = $region17
    $region16: #{_fused_mlp_forward.1} parent=1 // pred_region
      %33 = vsyncadd [#allocation6], 0
      %s34 = sshll.u32 %s3, 4
      %s35 = int_to_ptr.hbm [resolvable:$true] %s34
      %s36 = sshll.u32 [#allocation5], 4
      %s37 = int_to_ptr.vmem [resolvable:$true] %s36
      %42 = dma.hbm_to_vmem [thread:$0]  %s35, 2048, %s37, [#allocation6], 128, 128, 8
    $region17: #{_fused_mlp_forward.1} parent=1 // pred_fallthru
      _
    // Predicated region
    $region18: #{_fused_mlp_forward.1} parent=1 // pred_check
      _
    $region19: #{_fused_mlp_forward.1} parent=1 // pred_check_branch
      %44 = sbr.rel (0) target = $region21
    $region20: #{_fused_mlp_forward.1} parent=1 // pred_region
      _
    $region21: #{_fused_mlp_forward.1} parent=1 // pred_fallthru
      _
    // Predicated region
    $region22: #{_fused_mlp_forward.1} parent=1 // pred_check
      _
    $region23: #{_fused_mlp_forward.1} parent=1 // pred_check_branch
      %46 = sbr.rel (0) target = $region25
    $region24: #{_fused_mlp_forward.1} parent=1 // pred_region
      %48 = dma.done [#allocation3], 2048
    $region25: #{_fused_mlp_forward.1} parent=1 // pred_fallthru
      _
    // Predicated region
    $region26: #{_fused_mlp_forward.1} parent=1 // pred_check
      _
    $region27: #{_fused_mlp_forward.1} parent=1 // pred_check_branch
      %50 = sbr.rel (0) target = $region29
    $region28: #{_fused_mlp_forward.1} parent=1 // pred_region
      %52 = dma.done [#allocation6], 2048
    $region29: #{_fused_mlp_forward.1} parent=1 // pred_fallthru
      _
    %v53 = vld [vmem:[%s0] sm:$0xff]
    %v54 = vld [vmem:[#allocation2] sm:$0xff]
    %v55 = vld [vmem:[#allocation2 + $0x8] sm:$0xff]
    %v56 = vld [vmem:[#allocation2 + $0x10] sm:$0xff]
    %v57 = vld [vmem:[#allocation2 + $0x18] sm:$0xff]
    %v58 = vld [vmem:[#allocation2 + $0x20] sm:$0xff]
    %v59 = vld [vmem:[#allocation2 + $0x28] sm:$0xff]
    %v60 = vld [vmem:[#allocation2 + $0x30] sm:$0xff]
    %v61 = vld [vmem:[#allocation2 + $0x38] sm:$0xff]
    %v62 = vld [vmem:[#allocation2 + $0x40] sm:$0xff]
    %v63 = vld [vmem:[#allocation2 + $0x48] sm:$0xff]
    %v64 = vld [vmem:[#allocation2 + $0x50] sm:$0xff]
    %v65 = vld [vmem:[#allocation2 + $0x58] sm:$0xff]
    %v66 = vld [vmem:[#allocation2 + $0x60] sm:$0xff]
    %v67 = vld [vmem:[#allocation2 + $0x68] sm:$0xff]
    %v68 = vld [vmem:[#allocation2 + $0x70] sm:$0xff]
    %v69 = vld [vmem:[#allocation2 + $0x78] sm:$0xff]
    %v70 = vld [vmem:[%s2] sm:$0x1]
    %v72 = vperm.slane %v70, 0
    %74 = vmatpush.msra.mxu0 %v69
    %75 = vmatpush.msra.mxu0 %v68
    %76 = vmatpush.msra.mxu0 %v67
    %77 = vmatpush.msra.mxu0 %v66
    %78 = vmatpush.msra.mxu0 %v65
    %79 = vmatpush.msra.mxu0 %v64
    %80 = vmatpush.msra.mxu0 %v63
    %81 = vmatpush.msra.mxu0 %v62
    %82 = vmatpush.msra.mxu0 %v61
    %83 = vmatpush.msra.mxu0 %v60
    %84 = vmatpush.msra.mxu0 %v59
    %85 = vmatpush.msra.mxu0 %v58
    %86 = vmatpush.msra.mxu0 %v57
    %87 = vmatpush.msra.mxu0 %v56
    %88 = vmatpush.msra.mxu0 %v55
    %89 = vmatpush.msra.mxu0 %v54
    %90 = vmatmul.f32.gmra.mxu0 %v53
    %v91 = vpop.f32.mrf.mxu0
    %v92 = vadd.f32 %v72, %v91
    %93 = vdwg.mxu0
    %v94 = vtanh.pop %v92
    %v95 = vld [vmem:[#allocation5] sm:$0xff]
    %v96 = vld [vmem:[#allocation5 + $0x8] sm:$0xff]
    %v97 = vld [vmem:[#allocation5 + $0x10] sm:$0xff]
    %v98 = vld [vmem:[#allocation5 + $0x18] sm:$0xff]
    %v99 = vld [vmem:[#allocation5 + $0x20] sm:$0xff]
    %v100 = vld [vmem:[#allocation5 + $0x28] sm:$0xff]
    %v101 = vld [vmem:[#allocation5 + $0x30] sm:$0xff]
    %v102 = vld [vmem:[#allocation5 + $0x38] sm:$0xff]
    %v103 = vld [vmem:[#allocation5 + $0x40] sm:$0xff]
    %v104 = vld [vmem:[#allocation5 + $0x48] sm:$0xff]
    %v105 = vld [vmem:[#allocation5 + $0x50] sm:$0xff]
    %v106 = vld [vmem:[#allocation5 + $0x58] sm:$0xff]
    %v107 = vld [vmem:[#allocation5 + $0x60] sm:$0xff]
    %v108 = vld [vmem:[#allocation5 + $0x68] sm:$0xff]
    %v109 = vld [vmem:[#allocation5 + $0x70] sm:$0xff]
    %v110 = vld [vmem:[#allocation5 + $0x78] sm:$0xff]
    %v111 = vld [vmem:[%s4] sm:$0x1]
    %v113 = vperm.slane %v111, 0
    %115 = vmatpush.msra.mxu0 %v110
    %116 = vmatpush.msra.mxu0 %v109
    %117 = vmatpush.msra.mxu0 %v108
    %118 = vmatpush.msra.mxu0 %v107
    %119 = vmatpush.msra.mxu0 %v106
    %120 = vmatpush.msra.mxu0 %v105
    %121 = vmatpush.msra.mxu0 %v104
    %122 = vmatpush.msra.mxu0 %v103
    %123 = vmatpush.msra.mxu0 %v102
    %124 = vmatpush.msra.mxu0 %v101
    %125 = vmatpush.msra.mxu0 %v100
    %126 = vmatpush.msra.mxu0 %v99
    %127 = vmatpush.msra.mxu0 %v98
    %128 = vmatpush.msra.mxu0 %v97
    %129 = vmatpush.msra.mxu0 %v96
    %130 = vmatpush.msra.mxu0 %v95
    %131 = vmatmul.f32.gmra.mxu0 %v94
    %v132 = vpop.f32.mrf.mxu0
    %v133 = vadd.f32 %v113, %v132
    %134 = vdwg.mxu0
    %v135 = vtanh.pop %v133
    %136 = vst [vmem:[#allocation7] sm:$0xff] %v135
    // Predicated region
    $region30: #{_fused_mlp_forward.1} parent=1 // pred_check
      _
    $region31: #{_fused_mlp_forward.1} parent=1 // pred_check_branch
      %138 = sbr.rel (0) target = $region33
    $region32: #{_fused_mlp_forward.1} parent=1 // pred_region
      %140 = vsyncadd [#allocation4], 0
      %s142 = sshll.u32 [#allocation7], 4
      %s143 = int_to_ptr.vmem [resolvable:$true] %s142
      %s144 = sshll.u32 %s5, 4
      %s145 = int_to_ptr.hbm [resolvable:$true] %s144
      %147 = dma.vmem_to_hbm [thread:$0]  %s143, 128, %s145, [#allocation4]
    $region33: #{_fused_mlp_forward.1} parent=1 // pred_fallthru
      _
    // Predicated region
    $region34: #{_fused_mlp_forward.1} parent=1 // pred_check
      _
    $region35: #{_fused_mlp_forward.1} parent=1 // pred_check_branch
      %149 = sbr.rel (0) target = $region37
    $region36: #{_fused_mlp_forward.1} parent=1 // pred_region
      %151 = dma.done [#allocation4], 128
    $region37: #{_fused_mlp_forward.1} parent=1 // pred_fallthru
      _
    %152 = vsyncpa [#allocation3], 1
    %153 = vsyncpa [#allocation6], 1
    %154 = vsyncpa [#allocation4], 1

// kernel: _fused_mlp_forward.1
$region0: #{_fused_mlp_forward.1}
  #allocation0 [shape = 'u32[]', space=smem, size = 0x4, offset = 0x4, fixed_abs, tag = 'smem constant byte address 0x4 - core index']
  #allocation1 [shape = 'u32[72,128]{1,0:T(1,128)}', space=vmem, size = 0x9000, scoped, tag = 'internal scratch']
  %s0 = inlined_call_operand.vmem [shape: f32[8,128], index: 0, kind: input, shape index: {}]
  %s1 = inlined_call_operand.hbm [shape: f32[128,128], index: 1, kind: input, shape index: {}]
  %s2 = inlined_call_operand.vmem [shape: f32[1,128], index: 2, kind: input, shape index: {}]
  %s3 = inlined_call_operand.hbm [shape: f32[128,128], index: 3, kind: input, shape index: {}]
  %s4 = inlined_call_operand.vmem [shape: f32[1,128], index: 4, kind: input, shape index: {}]
  %s5 = inlined_call_operand.hbm [shape: f32[8,128], index: 5, kind: output, shape index: {}]
  %s6 = sld [smem:[#allocation0]]
  $region38: #{_fused_mlp_forward.1} parent=0
    _
  %s8 = ssub.s32 1, %s6
  %s9 = scalar_select 0, %s8, %s6
  $region1: #{_fused_mlp_forward.1} parent=0
    #allocation2 [shape = 'u8[65536]{0}', space=vmem, size = 0x10000, scoped, tag = 'input window, operand 1, single buffered']
    #allocation3 [shape = 's32[1]{0}', space=sflag, size = 0x4, scoped, tag = 'scoped memory for _fused_mlp_forward.1']
    #allocation4 [shape = 's32[1]{0}', space=sflag, size = 0x4, scoped, tag = 'scoped memory for _fused_mlp_forward.1']
    #allocation5 [shape = 'u8[65536]{0}', space=vmem, size = 0x10000, scoped, tag = 'input window, operand 3, single buffered']
    #allocation6 [shape = 's32[1]{0}', space=sflag, size = 0x4, scoped, tag = 'scoped memory for _fused_mlp_forward.1']
    #allocation7 [shape = 'u8[4096]{0}', space=vmem, size = 0x1000, scoped, tag = 'output window, operand 0, single buffered']
    %10 = vsyncpa [#allocation3], 0
    %11 = vsyncpa [#allocation6], 0
    %12 = vsyncpa [#allocation4], 0
    // Predicated region
    $region2: #{_fused_mlp_forward.1} parent=1 // pred_check
      _
    $region3: #{_fused_mlp_forward.1} parent=1 // pred_check_branch
      %14 = sbr.rel (0) target = $region5
    $region4: #{_fused_mlp_forward.1} parent=1 // pred_region
      _
    $region5: #{_fused_mlp_forward.1} parent=1 // pred_fallthru
      _
    // Predicated region
    $region6: #{_fused_mlp_forward.1} parent=1 // pred_check
      _
    $region7: #{_fused_mlp_forward.1} parent=1 // pred_check_branch
      %16 = sbr.rel (0) target = $region9
    $region8: #{_fused_mlp_forward.1} parent=1 // pred_region
      %18 = vsyncadd [#allocation3], 0
      %s19 = sshll.u32 %s1, 4
      %s20 = int_to_ptr.hbm [resolvable:$true] %s19
      %s21 = sshll.u32 [#allocation2], 4
      %s22 = int_to_ptr.vmem [resolvable:$true] %s21
      %27 = dma.hbm_to_vmem [thread:$0]  %s20, 2048, %s22, [#allocation3], 128, 128, 8
    $region9: #{_fused_mlp_forward.1} parent=1 // pred_fallthru
      _
    // Predicated region
    $region10: #{_fused_mlp_forward.1} parent=1 // pred_check
      _
    $region11: #{_fused_mlp_forward.1} parent=1 // pred_check_branch
      %29 = sbr.rel (0) target = $region13
    $region12: #{_fused_mlp_forward.1} parent=1 // pred_region
      _
    $region13: #{_fused_mlp_forward.1} parent=1 // pred_fallthru
      _
    // Predicated region
    $region14: #{_fused_mlp_forward.1} parent=1 // pred_check
      _
    $region15: #{_fused_mlp_forward.1} parent=1 // pred_check_branch
      %31 = sbr.rel (0) target = $region17
    $region16: #{_fused_mlp_forward.1} parent=1 // pred_region
      %33 = vsyncadd [#allocation6], 0
      %s34 = sshll.u32 %s3, 4
      %s35 = int_to_ptr.hbm [resolvable:$true] %s34
      %s36 = sshll.u32 [#allocation5], 4
      %s37 = int_to_ptr.vmem [resolvable:$true] %s36
      %42 = dma.hbm_to_vmem [thread:$0]  %s35, 2048, %s37, [#allocation6], 128, 128, 8
    $region17: #{_fused_mlp_forward.1} parent=1 // pred_fallthru
      _
    // Predicated region
    $region18: #{_fused_mlp_forward.1} parent=1 // pred_check
      _
    $region19: #{_fused_mlp_forward.1} parent=1 // pred_check_branch
      %44 = sbr.rel (0) target = $region21
    $region20: #{_fused_mlp_forward.1} parent=1 // pred_region
      _
    $region21: #{_fused_mlp_forward.1} parent=1 // pred_fallthru
      _
    // Predicated region
    $region22: #{_fused_mlp_forward.1} parent=1 // pred_check
      _
    $region23: #{_fused_mlp_forward.1} parent=1 // pred_check_branch
      %46 = sbr.rel (0) target = $region25
    $region24: #{_fused_mlp_forward.1} parent=1 // pred_region
      %48 = dma.done [#allocation3], 2048
    $region25: #{_fused_mlp_forward.1} parent=1 // pred_fallthru
      _
    // Predicated region
    $region26: #{_fused_mlp_forward.1} parent=1 // pred_check
      _
    $region27: #{_fused_mlp_forward.1} parent=1 // pred_check_branch
      %50 = sbr.rel (0) target = $region29
    $region28: #{_fused_mlp_forward.1} parent=1 // pred_region
      %52 = dma.done [#allocation6], 2048
    $region29: #{_fused_mlp_forward.1} parent=1 // pred_fallthru
      _
    %v53 = vld [vmem:[%s0] sm:$0xff]
    %v54 = vld [vmem:[#allocation2] sm:$0xff]
    %v55 = vld [vmem:[#allocation2 + $0x8] sm:$0xff]
    %v56 = vld [vmem:[#allocation2 + $0x10] sm:$0xff]
    %v57 = vld [vmem:[#allocation2 + $0x18] sm:$0xff]
    %v58 = vld [vmem:[#allocation2 + $0x20] sm:$0xff]
    %v59 = vld [vmem:[#allocation2 + $0x28] sm:$0xff]
    %v60 = vld [vmem:[#allocation2 + $0x30] sm:$0xff]
    %v61 = vld [vmem:[#allocation2 + $0x38] sm:$0xff]
    %v62 = vld [vmem:[#allocation2 + $0x40] sm:$0xff]
    %v63 = vld [vmem:[#allocation2 + $0x48] sm:$0xff]
    %v64 = vld [vmem:[#allocation2 + $0x50] sm:$0xff]
    %v65 = vld [vmem:[#allocation2 + $0x58] sm:$0xff]
    %v66 = vld [vmem:[#allocation2 + $0x60] sm:$0xff]
    %v67 = vld [vmem:[#allocation2 + $0x68] sm:$0xff]
    %v68 = vld [vmem:[#allocation2 + $0x70] sm:$0xff]
    %v69 = vld [vmem:[#allocation2 + $0x78] sm:$0xff]
    %v70 = vld [vmem:[%s2] sm:$0x1]
    %v72 = vperm.slane %v70, 0
    %74 = vmatpush.msra.mxu0 %v69
    %75 = vmatpush.msra.mxu0 %v68
    %76 = vmatpush.msra.mxu0 %v67
    %77 = vmatpush.msra.mxu0 %v66
    %78 = vmatpush.msra.mxu0 %v65
    %79 = vmatpush.msra.mxu0 %v64
    %80 = vmatpush.msra.mxu0 %v63
    %81 = vmatpush.msra.mxu0 %v62
    %82 = vmatpush.msra.mxu0 %v61
    %83 = vmatpush.msra.mxu0 %v60
    %84 = vmatpush.msra.mxu0 %v59
    %85 = vmatpush.msra.mxu0 %v58
    %86 = vmatpush.msra.mxu0 %v57
    %87 = vmatpush.msra.mxu0 %v56
    %88 = vmatpush.msra.mxu0 %v55
    %89 = vmatpush.msra.mxu0 %v54
    %90 = vmatmul.f32.gmra.mxu0 %v53
    %v91 = vpop.f32.mrf.mxu0
    %v92 = vadd.f32 %v72, %v91
    %93 = vdwg.mxu0
    %v94 = vtanh.pop %v92
    %v95 = vld [vmem:[#allocation5] sm:$0xff]
    %v96 = vld [vmem:[#allocation5 + $0x8] sm:$0xff]
    %v97 = vld [vmem:[#allocation5 + $0x10] sm:$0xff]
    %v98 = vld [vmem:[#allocation5 + $0x18] sm:$0xff]
    %v99 = vld [vmem:[#allocation5 + $0x20] sm:$0xff]
    %v100 = vld [vmem:[#allocation5 + $0x28] sm:$0xff]
    %v101 = vld [vmem:[#allocation5 + $0x30] sm:$0xff]
    %v102 = vld [vmem:[#allocation5 + $0x38] sm:$0xff]
    %v103 = vld [vmem:[#allocation5 + $0x40] sm:$0xff]
    %v104 = vld [vmem:[#allocation5 + $0x48] sm:$0xff]
    %v105 = vld [vmem:[#allocation5 + $0x50] sm:$0xff]
    %v106 = vld [vmem:[#allocation5 + $0x58] sm:$0xff]
    %v107 = vld [vmem:[#allocation5 + $0x60] sm:$0xff]
    %v108 = vld [vmem:[#allocation5 + $0x68] sm:$0xff]
    %v109 = vld [vmem:[#allocation5 + $0x70] sm:$0xff]
    %v110 = vld [vmem:[#allocation5 + $0x78] sm:$0xff]
    %v111 = vld [vmem:[%s4] sm:$0x1]
    %v113 = vperm.slane %v111, 0
    %115 = vmatpush.msra.mxu0 %v110
    %116 = vmatpush.msra.mxu0 %v109
    %117 = vmatpush.msra.mxu0 %v108
    %118 = vmatpush.msra.mxu0 %v107
    %119 = vmatpush.msra.mxu0 %v106
    %120 = vmatpush.msra.mxu0 %v105
    %121 = vmatpush.msra.mxu0 %v104
    %122 = vmatpush.msra.mxu0 %v103
    %123 = vmatpush.msra.mxu0 %v102
    %124 = vmatpush.msra.mxu0 %v101
    %125 = vmatpush.msra.mxu0 %v100
    %126 = vmatpush.msra.mxu0 %v99
    %127 = vmatpush.msra.mxu0 %v98
    %128 = vmatpush.msra.mxu0 %v97
    %129 = vmatpush.msra.mxu0 %v96
    %130 = vmatpush.msra.mxu0 %v95
    %131 = vmatmul.f32.gmra.mxu0 %v94
    %v132 = vpop.f32.mrf.mxu0
    %v133 = vadd.f32 %v113, %v132
    %134 = vdwg.mxu0
    %v135 = vtanh.pop %v133
    %136 = vst [vmem:[#allocation7] sm:$0xff] %v135
    // Predicated region
    $region30: #{_fused_mlp_forward.1} parent=1 // pred_check
      _
    $region31: #{_fused_mlp_forward.1} parent=1 // pred_check_branch
      %138 = sbr.rel (0) target = $region33
    $region32: #{_fused_mlp_forward.1} parent=1 // pred_region
      %140 = vsyncadd [#allocation4], 0
      %s142 = sshll.u32 [#allocation7], 4
      %s143 = int_to_ptr.vmem [resolvable:$true] %s142
      %s144 = sshll.u32 %s5, 4
      %s145 = int_to_ptr.hbm [resolvable:$true] %s144
      %147 = dma.vmem_to_hbm [thread:$0]  %s143, 128, %s145, [#allocation4]
    $region33: #{_fused_mlp_forward.1} parent=1 // pred_fallthru
      _
    // Predicated region
    $region34: #{_fused_mlp_forward.1} parent=1 // pred_check
      _
    $region35: #{_fused_mlp_forward.1} parent=1 // pred_check_branch
      %149 = sbr.rel (0) target = $region37
    $region36: #{_fused_mlp_forward.1} parent=1 // pred_region
      %151 = dma.done [#allocation4], 128
    $region37: #{_fused_mlp_forward.1} parent=1 // pred_fallthru
      _
    %152 = vsyncpa [#allocation3], 1
    %153 = vsyncpa [#allocation6], 1
    %154 = vsyncpa [#allocation4], 1

// kernel: _layered_mlp_forward.3
$region0: #{_layered_mlp_forward.3}
  #allocation0 [shape = 'u32[]', space=smem, size = 0x4, offset = 0x4, fixed_abs, tag = 'smem constant byte address 0x4 - core index']
  #allocation1 [shape = 'u32[72,128]{1,0:T(1,128)}', space=vmem, size = 0x9000, scoped, tag = 'internal scratch']
  #allocation2 [shape = 'f32[8,128]{1,0:T(8,128)}', space=vmem, size = 0x1000, scoped, tag = 'scratch operand']
  %s0 = inlined_call_operand.vmem [shape: f32[8,128], index: 0, kind: input, shape index: {}]
  %s1 = inlined_call_operand.vmem [shape: f32[128,128], index: 1, kind: input, shape index: {}]
  %s2 = inlined_call_operand.vmem [shape: f32[1,128], index: 2, kind: input, shape index: {}]
  %s3 = inlined_call_operand.hbm [shape: f32[8,128], index: 3, kind: output, shape index: {}]
  %s4 = sld [smem:[#allocation0]]
  $region30: #{_layered_mlp_forward.3} parent=0
    _
  %s6 = ssub.s32 1, %s4
  %s7 = scalar_select 0, %s6, %s4
  $region1: #{_layered_mlp_forward.3} parent=0
    #allocation3 [shape = 'u8[4096]{0}', space=vmem, size = 0x1000, scoped, tag = 'output window, operand 0, single buffered']
    #allocation4 [shape = 's32[1]{0}', space=sflag, size = 0x4, scoped, tag = 'scoped memory for _layered_mlp_forward.3']
    %8 = vsyncpa [#allocation4], 0
    // Predicated region
    $region2: #{_layered_mlp_forward.3} parent=1 // pred_check
      _
    $region3: #{_layered_mlp_forward.3} parent=1 // pred_check_branch
      %10 = sbr.rel (0) target = $region5
    $region4: #{_layered_mlp_forward.3} parent=1 // pred_region
      _
    $region5: #{_layered_mlp_forward.3} parent=1 // pred_fallthru
      _
    // Predicated region
    $region6: #{_layered_mlp_forward.3} parent=1 // pred_check
      _
    $region7: #{_layered_mlp_forward.3} parent=1 // pred_check_branch
      %12 = sbr.rel (0) target = $region9
    $region8: #{_layered_mlp_forward.3} parent=1 // pred_region
      _
    $region9: #{_layered_mlp_forward.3} parent=1 // pred_fallthru
      _
    // Predicated region
    $region10: #{_layered_mlp_forward.3} parent=1 // pred_check
      _
    $region11: #{_layered_mlp_forward.3} parent=1 // pred_check_branch
      %14 = sbr.rel (0) target = $region13
    $region12: #{_layered_mlp_forward.3} parent=1 // pred_region
      _
    $region13: #{_layered_mlp_forward.3} parent=1 // pred_fallthru
      _
    %p15 = scmp.eq.s32.totalorder 0, 0
    // Predicated region
    $region14: #{_layered_mlp_forward.3} parent=1 // pred_check
      %p16 = pneg %p15
    $region15: #{_layered_mlp_forward.3} parent=1 // pred_check_branch
      %18 = sbr.rel (%p16) target = $region17
    $region16: #{_layered_mlp_forward.3} parent=1 // pred_region
      %19 = vst [vmem:[#allocation2] sm:$0xff] 0.0
    $region17: #{_layered_mlp_forward.3} parent=1 // pred_fallthru
      _
    %v20 = vld [vmem:[%s1] sm:$0xff]
    %v21 = vld [vmem:[%s1 + $0x8] sm:$0xff]
    %v22 = vld [vmem:[%s1 + $0x10] sm:$0xff]
    %v23 = vld [vmem:[%s1 + $0x18] sm:$0xff]
    %v24 = vld [vmem:[%s1 + $0x20] sm:$0xff]
    %v25 = vld [vmem:[%s1 + $0x28] sm:$0xff]
    %v26 = vld [vmem:[%s1 + $0x30] sm:$0xff]
    %v27 = vld [vmem:[%s1 + $0x38] sm:$0xff]
    %v28 = vld [vmem:[%s1 + $0x40] sm:$0xff]
    %v29 = vld [vmem:[%s1 + $0x48] sm:$0xff]
    %v30 = vld [vmem:[%s1 + $0x50] sm:$0xff]
    %v31 = vld [vmem:[%s1 + $0x58] sm:$0xff]
    %v32 = vld [vmem:[%s1 + $0x60] sm:$0xff]
    %v33 = vld [vmem:[%s1 + $0x68] sm:$0xff]
    %v34 = vld [vmem:[%s1 + $0x70] sm:$0xff]
    %v35 = vld [vmem:[%s1 + $0x78] sm:$0xff]
    %v36 = vld [vmem:[#allocation2] sm:$0xff]
    %v37 = vld [vmem:[%s0] sm:$0xff]
    %38 = vmatpush.msra.mxu0 %v35
    %39 = vmatpush.msra.mxu0 %v34
    %40 = vmatpush.msra.mxu0 %v33
    %41 = vmatpush.msra.mxu0 %v32
    %42 = vmatpush.msra.mxu0 %v31
    %43 = vmatpush.msra.mxu0 %v30
    %44 = vmatpush.msra.mxu0 %v29
    %45 = vmatpush.msra.mxu0 %v28
    %46 = vmatpush.msra.mxu0 %v27
    %47 = vmatpush.msra.mxu0 %v26
    %48 = vmatpush.msra.mxu0 %v25
    %49 = vmatpush.msra.mxu0 %v24
    %50 = vmatpush.msra.mxu0 %v23
    %51 = vmatpush.msra.mxu0 %v22
    %52 = vmatpush.msra.mxu0 %v21
    %53 = vmatpush.msra.mxu0 %v20
    %54 = vmatmul.f32.gmra.mxu0 %v37
    %v55 = vpop.f32.mrf.mxu0
    %v56 = vadd.f32 0.0, %v55
    %57 = vdwg.mxu0
    %v58 = vadd.f32 %v36, %v56
    %59 = vst [vmem:[#allocation2] sm:$0xff] %v58
    // Predicated region
    $region18: #{_layered_mlp_forward.3} parent=1 // pred_check
      %p60 = pneg %p15
    $region19: #{_layered_mlp_forward.3} parent=1 // pred_check_branch
      %62 = sbr.rel (%p60) target = $region21
    $region20: #{_layered_mlp_forward.3} parent=1 // pred_region
      %v63 = vld [vmem:[#allocation2] sm:$0xff]
      %v64 = vld [vmem:[%s2] sm:$0x1]
      %v66 = vperm.slane %v64, 0
      %v68 = vadd.f32 %v63, %v66
      %v69 = vtanh.pop %v68
      %70 = vst [vmem:[#allocation3] sm:$0xff] %v69
    $region21: #{_layered_mlp_forward.3} parent=1 // pred_fallthru
      _
    // Predicated region
    $region22: #{_layered_mlp_forward.3} parent=1 // pred_check
      _
    $region23: #{_layered_mlp_forward.3} parent=1 // pred_check_branch
      %72 = sbr.rel (0) target = $region25
    $region24: #{_layered_mlp_forward.3} parent=1 // pred_region
      %74 = vsyncadd [#allocation4], 0
      %s76 = sshll.u32 [#allocation3], 4
      %s77 = int_to_ptr.vmem [resolvable:$true] %s76
      %s78 = sshll.u32 %s3, 4
      %s79 = int_to_ptr.hbm [resolvable:$true] %s78
      %81 = dma.vmem_to_hbm [thread:$0]  %s77, 128, %s79, [#allocation4]
    $region25: #{_layered_mlp_forward.3} parent=1 // pred_fallthru
      _
    // Predicated region
    $region26: #{_layered_mlp_forward.3} parent=1 // pred_check
      _
    $region27: #{_layered_mlp_forward.3} parent=1 // pred_check_branch
      %83 = sbr.rel (0) target = $region29
    $region28: #{_layered_mlp_forward.3} parent=1 // pred_region
      %85 = dma.done [#allocation4], 128
    $region29: #{_layered_mlp_forward.3} parent=1 // pred_fallthru
      _
    %86 = vsyncpa [#allocation4], 1

// kernel: _layered_mlp_forward.2
$region0: #{_layered_mlp_forward.2}
  #allocation0 [shape = 'u32[]', space=smem, size = 0x4, offset = 0x4, fixed_abs, tag = 'smem constant byte address 0x4 - core index']
  #allocation1 [shape = 'u32[72,128]{1,0:T(1,128)}', space=vmem, size = 0x9000, scoped, tag = 'internal scratch']
  #allocation2 [shape = 'f32[8,128]{1,0:T(8,128)}', space=vmem, size = 0x1000, scoped, tag = 'scratch operand']
  %s0 = inlined_call_operand.vmem [shape: f32[8,128], index: 0, kind: input, shape index: {}]
  %s1 = inlined_call_operand.hbm [shape: f32[128,128], index: 1, kind: input, shape index: {}]
  %s2 = inlined_call_operand.hbm [shape: f32[1,128], index: 2, kind: input, shape index: {}]
  %s3 = inlined_call_operand.vmem [shape: f32[8,128], index: 3, kind: output, shape index: {}]
  %s4 = sld [smem:[#allocation0]]
  $region38: #{_layered_mlp_forward.2} parent=0
    _
  %s6 = ssub.s32 1, %s4
  %s7 = scalar_select 0, %s6, %s4
  $region1: #{_layered_mlp_forward.2} parent=0
    #allocation3 [shape = 'u8[65536]{0}', space=vmem, size = 0x10000, scoped, tag = 'input window, operand 1, single buffered']
    #allocation4 [shape = 's32[1]{0}', space=sflag, size = 0x4, scoped, tag = 'scoped memory for _layered_mlp_forward.2']
    #allocation5 [shape = 'u8[512]{0}', space=vmem, size = 0x400, scoped, tag = 'input window, operand 2, single buffered']
    #allocation6 [shape = 's32[1]{0}', space=sflag, size = 0x4, scoped, tag = 'scoped memory for _layered_mlp_forward.2']
    %8 = vsyncpa [#allocation4], 0
    %9 = vsyncpa [#allocation6], 0
    // Predicated region
    $region2: #{_layered_mlp_forward.2} parent=1 // pred_check
      _
    $region3: #{_layered_mlp_forward.2} parent=1 // pred_check_branch
      %11 = sbr.rel (0) target = $region5
    $region4: #{_layered_mlp_forward.2} parent=1 // pred_region
      _
    $region5: #{_layered_mlp_forward.2} parent=1 // pred_fallthru
      _
    // Predicated region
    $region6: #{_layered_mlp_forward.2} parent=1 // pred_check
      _
    $region7: #{_layered_mlp_forward.2} parent=1 // pred_check_branch
      %13 = sbr.rel (0) target = $region9
    $region8: #{_layered_mlp_forward.2} parent=1 // pred_region
      %15 = vsyncadd [#allocation4], 0
      %s16 = sshll.u32 %s1, 4
      %s17 = int_to_ptr.hbm [resolvable:$true] %s16
      %s18 = sshll.u32 [#allocation3], 4
      %s19 = int_to_ptr.vmem [resolvable:$true] %s18
      %24 = dma.hbm_to_vmem [thread:$0]  %s17, 2048, %s19, [#allocation4], 128, 128, 8
    $region9: #{_layered_mlp_forward.2} parent=1 // pred_fallthru
      _
    // Predicated region
    $region10: #{_layered_mlp_forward.2} parent=1 // pred_check
      _
    $region11: #{_layered_mlp_forward.2} parent=1 // pred_check_branch
      %26 = sbr.rel (0) target = $region13
    $region12: #{_layered_mlp_forward.2} parent=1 // pred_region
      %28 = vsyncadd [#allocation6], 0
      %s30 = sshll.u32 %s2, 4
      %s31 = int_to_ptr.hbm [resolvable:$true] %s30
      %s32 = sshll.u32 [#allocation5], 4
      %s33 = int_to_ptr.vmem [resolvable:$true] %s32
      %35 = dma.hbm_to_vmem [thread:$0]  %s31, 16, %s33, [#allocation6]
    $region13: #{_layered_mlp_forward.2} parent=1 // pred_fallthru
      _
    // Predicated region
    $region14: #{_layered_mlp_forward.2} parent=1 // pred_check
      _
    $region15: #{_layered_mlp_forward.2} parent=1 // pred_check_branch
      %37 = sbr.rel (0) target = $region17
    $region16: #{_layered_mlp_forward.2} parent=1 // pred_region
      %39 = dma.done [#allocation4], 2048
    $region17: #{_layered_mlp_forward.2} parent=1 // pred_fallthru
      _
    // Predicated region
    $region18: #{_layered_mlp_forward.2} parent=1 // pred_check
      _
    $region19: #{_layered_mlp_forward.2} parent=1 // pred_check_branch
      %41 = sbr.rel (0) target = $region21
    $region20: #{_layered_mlp_forward.2} parent=1 // pred_region
      %43 = dma.done [#allocation6], 16
    $region21: #{_layered_mlp_forward.2} parent=1 // pred_fallthru
      _
    %p44 = scmp.eq.s32.totalorder 0, 0
    // Predicated region
    $region22: #{_layered_mlp_forward.2} parent=1 // pred_check
      %p45 = pneg %p44
    $region23: #{_layered_mlp_forward.2} parent=1 // pred_check_branch
      %47 = sbr.rel (%p45) target = $region25
    $region24: #{_layered_mlp_forward.2} parent=1 // pred_region
      %48 = vst [vmem:[#allocation2] sm:$0xff] 0.0
    $region25: #{_layered_mlp_forward.2} parent=1 // pred_fallthru
      _
    %v49 = vld [vmem:[#allocation3] sm:$0xff]
    %v50 = vld [vmem:[#allocation3 + $0x8] sm:$0xff]
    %v51 = vld [vmem:[#allocation3 + $0x10] sm:$0xff]
    %v52 = vld [vmem:[#allocation3 + $0x18] sm:$0xff]
    %v53 = vld [vmem:[#allocation3 + $0x20] sm:$0xff]
    %v54 = vld [vmem:[#allocation3 + $0x28] sm:$0xff]
    %v55 = vld [vmem:[#allocation3 + $0x30] sm:$0xff]
    %v56 = vld [vmem:[#allocation3 + $0x38] sm:$0xff]
    %v57 = vld [vmem:[#allocation3 + $0x40] sm:$0xff]
    %v58 = vld [vmem:[#allocation3 + $0x48] sm:$0xff]
    %v59 = vld [vmem:[#allocation3 + $0x50] sm:$0xff]
    %v60 = vld [vmem:[#allocation3 + $0x58] sm:$0xff]
    %v61 = vld [vmem:[#allocation3 + $0x60] sm:$0xff]
    %v62 = vld [vmem:[#allocation3 + $0x68] sm:$0xff]
    %v63 = vld [vmem:[#allocation3 + $0x70] sm:$0xff]
    %v64 = vld [vmem:[#allocation3 + $0x78] sm:$0xff]
    %v65 = vld [vmem:[#allocation2] sm:$0xff]
    %v66 = vld [vmem:[%s0] sm:$0xff]
    %67 = vmatpush.msra.mxu0 %v64
    %68 = vmatpush.msra.mxu0 %v63
    %69 = vmatpush.msra.mxu0 %v62
    %70 = vmatpush.msra.mxu0 %v61
    %71 = vmatpush.msra.mxu0 %v60
    %72 = vmatpush.msra.mxu0 %v59
    %73 = vmatpush.msra.mxu0 %v58
    %74 = vmatpush.msra.mxu0 %v57
    %75 = vmatpush.msra.mxu0 %v56
    %76 = vmatpush.msra.mxu0 %v55
    %77 = vmatpush.msra.mxu0 %v54
    %78 = vmatpush.msra.mxu0 %v53
    %79 = vmatpush.msra.mxu0 %v52
    %80 = vmatpush.msra.mxu0 %v51
    %81 = vmatpush.msra.mxu0 %v50
    %82 = vmatpush.msra.mxu0 %v49
    %83 = vmatmul.f32.gmra.mxu0 %v66
    %v84 = vpop.f32.mrf.mxu0
    %v85 = vadd.f32 0.0, %v84
    %86 = vdwg.mxu0
    %v87 = vadd.f32 %v65, %v85
    %88 = vst [vmem:[#allocation2] sm:$0xff] %v87
    // Predicated region
    $region26: #{_layered_mlp_forward.2} parent=1 // pred_check
      %p89 = pneg %p44
    $region27: #{_layered_mlp_forward.2} parent=1 // pred_check_branch
      %91 = sbr.rel (%p89) target = $region29
    $region28: #{_layered_mlp_forward.2} parent=1 // pred_region
      %v92 = vld [vmem:[#allocation2] sm:$0xff]
      %v93 = vld [vmem:[#allocation5] sm:$0x1]
      %v95 = vperm.slane %v93, 0
      %v97 = vadd.f32 %v92, %v95
      %v98 = vtanh.pop %v97
      %99 = vst [vmem:[%s3] sm:$0xff] %v98
    $region29: #{_layered_mlp_forward.2} parent=1 // pred_fallthru
      _
    // Predicated region
    $region30: #{_layered_mlp_forward.2} parent=1 // pred_check
      _
    $region31: #{_layered_mlp_forward.2} parent=1 // pred_check_branch
      %101 = sbr.rel (0) target = $region33
    $region32: #{_layered_mlp_forward.2} parent=1 // pred_region
      _
    $region33: #{_layered_mlp_forward.2} parent=1 // pred_fallthru
      _
    // Predicated region
    $region34: #{_layered_mlp_forward.2} parent=1 // pred_check
      _
    $region35: #{_layered_mlp_forward.2} parent=1 // pred_check_branch
      %103 = sbr.rel (0) target = $region37
    $region36: #{_layered_mlp_forward.2} parent=1 // pred_region
      _
    $region37: #{_layered_mlp_forward.2} parent=1 // pred_fallthru
      _
    %104 = vsyncpa [#allocation4], 1
    %105 = vsyncpa [#allocation6], 1

</llo_original>
